<compile_context>
chip_gen: v7x
topology: tpu7x:2x2x1
jax: 0.10.0
libtpu: 0.0.40
codegen_flags: <defaults>
</compile_context>

<pallas_src>
import functools
import math

import jax
import jax.numpy as jnp
from jax import lax
from jax.experimental import pallas as pl
from jax.experimental.pallas import tpu as pltpu


def _fused_linear_softmax_kernel(vocab_size, x_ref, w_ref, b_ref,
                                 logits_ref, probs_ref):
    v = vocab_size
    # Cast int32 token ids to f32 on the VPU (free inside the kernel).
    x = x_ref[...].astype(jnp.float32)                      # (B, S_in)
    w = w_ref[...]                                          # (TN, S_in) untransposed tile
    b = b_ref[...]                                          # (1, TN) lane-dense bias tile

    # MXU matmul producing the native lane-dense (B, TN) layout:
    # contract S_in of both operands (x @ W^T), f32 accumulation, + bias.
    logits = lax.dot_general(
        x, w,
        dimension_numbers=(((1,), (1,)), ((), ())),
        preferred_element_type=jnp.float32) + b             # (B, TN)
    logits_ref[...] = logits                                # unmasked lane-dense vst

    bsz, tn = logits.shape
    if v % 128 == 0:
        # Whole vocab groups are lane-aligned multiples of 128: lane-preserving
        # reshape + reduce over the last axis.
        g = logits.reshape(bsz, tn // v, v)
        m = jnp.max(g, axis=-1, keepdims=True)
        e = jnp.exp(g - m)
        s = jnp.sum(e, axis=-1, keepdims=True)
        probs_ref[...] = (e / s).reshape(bsz, tn)
    else:
        # V is a power of two <= 128: XOR-butterfly segmented all-reduce within
        # each group of V consecutive lanes.  Partner lane i XOR d always stays
        # inside the group, so plain rolls + a select give a segmented reduce.
        lane = lax.broadcasted_iota(jnp.int32, logits.shape, 1)

        def group_allreduce(vals, op):
            r = vals
            d = 1
            while d < v:
                fwd = pltpu.roll(r, shift=tn - d, axis=1)   # value from lane i + d
                bwd = pltpu.roll(r, shift=d, axis=1)        # value from lane i - d
                r = op(r, jnp.where((lane & d) == 0, fwd, bwd))
                d *= 2
            return r

        m = group_allreduce(logits, jnp.maximum)            # group max, broadcast per lane
        e = jnp.exp(logits - m)
        s = group_allreduce(e, jnp.add)                     # group sum, broadcast per lane
        probs_ref[...] = e / s


def _vmem_budget():
    """Per-generation (working-set budget, vmem_limit_bytes)."""
    cap = 64 << 20                       # v7x-safe fallback (smallest VMEM per TC)
    try:
        info = pltpu.get_tpu_info()
        cap = int(getattr(info, "vmem_capacity_bytes", cap)) or cap
    except Exception:
        pass
    budget = (cap * 5) // 8              # target working set, leave headroom
    limit = min((cap * 3) // 4, 112 << 20)
    return budget, limit


def _working_set_bytes(block_n, s_in, batch):
    return (2 * block_n * s_in * 4            # double-buffered weight tile
            + 2 * 2 * batch * block_n * 4     # two double-buffered output tiles
            + 2 * block_n * 4                 # double-buffered bias tile
            + 2 * batch * s_in * 4            # token ids
            + 8 * batch * block_n * 4)        # softmax temporaries (generous)


def _pick_block_n(n, v, s_in, batch, budget_bytes):
    # block_n must cover whole vocab groups (multiple of V) and stay lane-dense
    # (multiple of 128); pick the largest such divisor of N that fits the budget.
    unit = (128 * v) // math.gcd(128, v)
    if n % unit != 0:
        # Full-axis block is always legal (block == full array dims).
        if _working_set_bytes(n, s_in, batch) <= budget_bytes:
            return n
        raise ValueError(
            f"out_features={n} is not tileable into lane-dense whole-vocab-group "
            f"blocks (unit={unit}) and does not fit VMEM as a single tile.")
    cands = [c for c in range(unit, n + 1, unit) if n % c == 0]
    fitting = [c for c in cands if _working_set_bytes(c, s_in, batch) <= budget_bytes]
    if not fitting:
        return unit                      # smallest legal tile; let the compiler decide
    best = max(fitting)
    if n // best == 1:
        # Prefer >=2 grid steps (keeps both v7x TensorCores busy) if a still
        # reasonably large (>=1 MiB) weight tile allows it.
        smaller = [c for c in fitting if n // c >= 2 and c * s_in * 4 >= (1 << 20)]
        if smaller:
            best = max(smaller)
    return best


def dummy_llm_forward(input_ids, weight, bias, vocab_size):
    """Fused Linear + softmax. Returns (output, logits) like DummyForwardOutput."""
    batch, s_in = input_ids.shape
    n, s_w = weight.shape
    assert s_w == s_in, "weight in_features must match input width"
    assert n % vocab_size == 0, "out_features must be (input_size+max_tokens)*vocab"
    is_pow2 = (vocab_size & (vocab_size - 1)) == 0
    assert (vocab_size % 128 == 0) or (is_pow2 and vocab_size <= 128), (
        "vocab_size must be a power of two <= 128 or a multiple of 128")
    # TODO(synk): support arbitrary vocab_size via padded groups / masked reduce.
    seq = n // vocab_size                       # == input_size + max_tokens

    budget, vmem_limit = _vmem_budget()
    block_n = _pick_block_n(n, vocab_size, s_in, batch, budget)
    grid = (n // block_n,)
    bias_row = bias.reshape(1, n)               # free metadata reshape, lane-dense

    cost = pl.CostEstimate(
        flops=2 * batch * n * s_in,
        transcendentals=batch * n,
        bytes_accessed=(weight.size + bias.size + input_ids.size + 2 * batch * n) * 4,
    )

    kernel = functools.partial(_fused_linear_softmax_kernel, vocab_size)
    logits_flat, probs_flat = pl.pallas_call(
        kernel,
        out_shape=(
            jax.ShapeDtypeStruct((batch, n), jnp.float32),   # logits, lane-dense
            jax.ShapeDtypeStruct((batch, n), jnp.float32),   # probs, lane-dense
        ),
        grid=grid,
        in_specs=[
            pl.BlockSpec((batch, s_in), lambda j: (0, 0)),    # int32 ids (cast in kernel)
            pl.BlockSpec((block_n, s_in), lambda j: (j, 0)),  # untransposed weight tile
            pl.BlockSpec((1, block_n), lambda j: (0, j)),     # lane-dense bias tile
        ],
        out_specs=(
            pl.BlockSpec((batch, block_n), lambda j: (0, j)),
            pl.BlockSpec((batch, block_n), lambda j: (0, j)),
        ),
        compiler_params=pltpu.CompilerParams(
            dimension_semantics=("parallel",),
            vmem_limit_bytes=vmem_limit),
        cost_estimate=cost,
    )(input_ids, weight, bias_row)

    logits = logits_flat.reshape(batch, seq, vocab_size)
    output = probs_flat.reshape(batch, seq, vocab_size)
    return output, logits


if __name__ == "__main__":
    # Small shapes consistent with the module.
    input_size = 4
    max_tokens = 4
    vocab_size = 16
    batch = 2
    S = input_size + max_tokens                 # 8
    out_features = S * vocab_size               # 128

    key = jax.random.PRNGKey(0)
    k_ids, k_w, k_b = jax.random.split(key, 3)

    # Deterministic init mimicking nn.Linear's U(-1/sqrt(in), 1/sqrt(in)).
    bound = 1.0 / jnp.sqrt(jnp.float32(S))
    weight = jax.random.uniform(
        k_w, (out_features, S), jnp.float32, minval=-bound, maxval=bound)
    bias = jax.random.uniform(
        k_b, (out_features,), jnp.float32, minval=-bound, maxval=bound)

    # "input_ids": integer tokens, cast to float inside the kernel.
    input_ids = jax.random.randint(
        k_ids, (batch, S), 0, vocab_size, dtype=jnp.int32)

    output, logits = dummy_llm_forward(input_ids, weight, bias, vocab_size)
    output, logits = jax.block_until_ready((output, logits))

    # Sanity check against a plain-JAX reference.
    x_f = input_ids.astype(jnp.float32)
    ref_logits = (x_f @ weight.T + bias).reshape(batch, S, vocab_size)
    ref_output = jax.nn.softmax(ref_logits, axis=-1)
    assert logits.shape == (batch, S, vocab_size)
    assert output.shape == (batch, S, vocab_size)
    assert jnp.allclose(logits, ref_logits, atol=1e-5, rtol=1e-5)
    assert jnp.allclose(output, ref_output, atol=1e-5, rtol=1e-5)

    print("KERNEL_OK")
</pallas_src>

<mosaic_0001>
module attributes {stable_mosaic.version = 11 : i64} {
  func.func @_fused_linear_softmax_kernel(%arg0: i32, %arg1: memref<2x8xi32, #tpu.memory_space<vmem>>, %arg2: memref<128x8xf32, #tpu.memory_space<vmem>>, %arg3: memref<1x128xf32, #tpu.memory_space<vmem>>, %arg4: memref<2x128xf32, #tpu.memory_space<vmem>>, %arg5: memref<2x128xf32, #tpu.memory_space<vmem>>) attributes {dimension_semantics = [#tpu.dimension_semantics<parallel>], iteration_bounds = array<i64: 1>, scalar_prefetch = 0 : i64, scratch_operands = 0 : i64, tpu.core_type = #tpu.core_type<tc>, window_params = [{pipeline_mode = #tpu.pipeline_mode<synchronous>, transform_indices = @transform_0, window_bounds = array<i64: 2, 8>}, {transform_indices = @transform_1, window_bounds = array<i64: 128, 8>}, {transform_indices = @transform_2, window_bounds = array<i64: 1, 128>}, {transform_indices = @transform_3, window_bounds = array<i64: 2, 128>}, {transform_indices = @transform_4, window_bounds = array<i64: 2, 128>}]} {
    %c0 = arith.constant 0 : index
    %c0_0 = arith.constant 0 : index
    %0 = vector.load %arg1[%c0, %c0_0] : memref<2x8xi32, #tpu.memory_space<vmem>>, vector<2x8xi32>
    %1 = arith.sitofp %0 : vector<2x8xi32> to vector<2x8xf32>
    %c0_1 = arith.constant 0 : index
    %c0_2 = arith.constant 0 : index
    %2 = vector.load %arg2[%c0_1, %c0_2] : memref<128x8xf32, #tpu.memory_space<vmem>>, vector<128x8xf32>
    %c0_3 = arith.constant 0 : index
    %c0_4 = arith.constant 0 : index
    %3 = vector.load %arg3[%c0_3, %c0_4] : memref<1x128xf32, #tpu.memory_space<vmem>>, vector<1x128xf32>
    %cst = arith.constant dense<0.000000e+00> : vector<2x128xf32>
    %4 = tpu.matmul %1, %2, %cst {dimension_numbers = #tpu.dot_dimension_numbers<[1], [1], [0], [0], [0, 0, 1, 0], [], []>} : vector<2x8xf32>, vector<128x8xf32>, vector<2x128xf32> -> vector<2x128xf32>
    %5 = vector.broadcast %3 : vector<1x128xf32> to vector<2x128xf32>
    %6 = arith.addf %4, %5 : vector<2x128xf32>
    %c0_5 = arith.constant 0 : index
    %c0_6 = arith.constant 0 : index
    %7 = vector.load %arg4[%c0_5, %c0_6] : memref<2x128xf32, #tpu.memory_space<vmem>>, vector<2x128xf32>
    tpu.vector_store %arg4[%c0_5, %c0_6], %6 {strides = array<i32>} : memref<2x128xf32, #tpu.memory_space<vmem>>, vector<2x128xf32>,
    %8 = tpu.iota {dimensions = array<i32: 1>} : vector<2x128xi32>
    %c127_i32 = arith.constant 127 : i32
    %9 = tpu.dynamic_rotate %6 by %c127_i32 dim 1 : vector<2x128xf32>, i32 -> vector<2x128xf32>
    %c1_i32 = arith.constant 1 : i32
    %10 = tpu.dynamic_rotate %6 by %c1_i32 dim 1 : vector<2x128xf32>, i32 -> vector<2x128xf32>
    %c1_i32_7 = arith.constant 1 : i32
    %11 = vector.broadcast %c1_i32_7 : i32 to vector<2x128xi32>
    %12 = arith.andi %8, %11 : vector<2x128xi32>
    %c0_i32 = arith.constant 0 : i32
    %13 = vector.broadcast %c0_i32 : i32 to vector<2x128xi32>
    %14 = arith.cmpi eq, %12, %13 : vector<2x128xi32>
    %15 = arith.select %14, %9, %10 : vector<2x128xi1>, vector<2x128xf32>
    %16 = arith.maximumf %6, %15 : vector<2x128xf32>
    %c126_i32 = arith.constant 126 : i32
    %17 = tpu.dynamic_rotate %16 by %c126_i32 dim 1 : vector<2x128xf32>, i32 -> vector<2x128xf32>
    %c2_i32 = arith.constant 2 : i32
    %18 = tpu.dynamic_rotate %16 by %c2_i32 dim 1 : vector<2x128xf32>, i32 -> vector<2x128xf32>
    %c2_i32_8 = arith.constant 2 : i32
    %19 = vector.broadcast %c2_i32_8 : i32 to vector<2x128xi32>
    %20 = arith.andi %8, %19 : vector<2x128xi32>
    %c0_i32_9 = arith.constant 0 : i32
    %21 = vector.broadcast %c0_i32_9 : i32 to vector<2x128xi32>
    %22 = arith.cmpi eq, %20, %21 : vector<2x128xi32>
    %23 = arith.select %22, %17, %18 : vector<2x128xi1>, vector<2x128xf32>
    %24 = arith.maximumf %16, %23 : vector<2x128xf32>
    %c124_i32 = arith.constant 124 : i32
    %25 = tpu.dynamic_rotate %24 by %c124_i32 dim 1 : vector<2x128xf32>, i32 -> vector<2x128xf32>
    %c4_i32 = arith.constant 4 : i32
    %26 = tpu.dynamic_rotate %24 by %c4_i32 dim 1 : vector<2x128xf32>, i32 -> vector<2x128xf32>
    %c4_i32_10 = arith.constant 4 : i32
    %27 = vector.broadcast %c4_i32_10 : i32 to vector<2x128xi32>
    %28 = arith.andi %8, %27 : vector<2x128xi32>
    %c0_i32_11 = arith.constant 0 : i32
    %29 = vector.broadcast %c0_i32_11 : i32 to vector<2x128xi32>
    %30 = arith.cmpi eq, %28, %29 : vector<2x128xi32>
    %31 = arith.select %30, %25, %26 : vector<2x128xi1>, vector<2x128xf32>
    %32 = arith.maximumf %24, %31 : vector<2x128xf32>
    %c120_i32 = arith.constant 120 : i32
    %33 = tpu.dynamic_rotate %32 by %c120_i32 dim 1 : vector<2x128xf32>, i32 -> vector<2x128xf32>
    %c8_i32 = arith.constant 8 : i32
    %34 = tpu.dynamic_rotate %32 by %c8_i32 dim 1 : vector<2x128xf32>, i32 -> vector<2x128xf32>
    %c8_i32_12 = arith.constant 8 : i32
    %35 = vector.broadcast %c8_i32_12 : i32 to vector<2x128xi32>
    %36 = arith.andi %8, %35 : vector<2x128xi32>
    %c0_i32_13 = arith.constant 0 : i32
    %37 = vector.broadcast %c0_i32_13 : i32 to vector<2x128xi32>
    %38 = arith.cmpi eq, %36, %37 : vector<2x128xi32>
    %39 = arith.select %38, %33, %34 : vector<2x128xi1>, vector<2x128xf32>
    %40 = arith.maximumf %32, %39 : vector<2x128xf32>
    %41 = arith.subf %6, %40 : vector<2x128xf32>
    %42 = math.exp %41 : vector<2x128xf32>
    %c127_i32_14 = arith.constant 127 : i32
    %43 = tpu.dynamic_rotate %42 by %c127_i32_14 dim 1 : vector<2x128xf32>, i32 -> vector<2x128xf32>
    %c1_i32_15 = arith.constant 1 : i32
    %44 = tpu.dynamic_rotate %42 by %c1_i32_15 dim 1 : vector<2x128xf32>, i32 -> vector<2x128xf32>
    %c1_i32_16 = arith.constant 1 : i32
    %45 = vector.broadcast %c1_i32_16 : i32 to vector<2x128xi32>
    %46 = arith.andi %8, %45 : vector<2x128xi32>
    %c0_i32_17 = arith.constant 0 : i32
    %47 = vector.broadcast %c0_i32_17 : i32 to vector<2x128xi32>
    %48 = arith.cmpi eq, %46, %47 : vector<2x128xi32>
    %49 = arith.select %48, %43, %44 : vector<2x128xi1>, vector<2x128xf32>
    %50 = arith.addf %42, %49 : vector<2x128xf32>
    %c126_i32_18 = arith.constant 126 : i32
    %51 = tpu.dynamic_rotate %50 by %c126_i32_18 dim 1 : vector<2x128xf32>, i32 -> vector<2x128xf32>
    %c2_i32_19 = arith.constant 2 : i32
    %52 = tpu.dynamic_rotate %50 by %c2_i32_19 dim 1 : vector<2x128xf32>, i32 -> vector<2x128xf32>
    %c2_i32_20 = arith.constant 2 : i32
    %53 = vector.broadcast %c2_i32_20 : i32 to vector<2x128xi32>
    %54 = arith.andi %8, %53 : vector<2x128xi32>
    %c0_i32_21 = arith.constant 0 : i32
    %55 = vector.broadcast %c0_i32_21 : i32 to vector<2x128xi32>
    %56 = arith.cmpi eq, %54, %55 : vector<2x128xi32>
    %57 = arith.select %56, %51, %52 : vector<2x128xi1>, vector<2x128xf32>
    %58 = arith.addf %50, %57 : vector<2x128xf32>
    %c124_i32_22 = arith.constant 124 : i32
    %59 = tpu.dynamic_rotate %58 by %c124_i32_22 dim 1 : vector<2x128xf32>, i32 -> vector<2x128xf32>
    %c4_i32_23 = arith.constant 4 : i32
    %60 = tpu.dynamic_rotate %58 by %c4_i32_23 dim 1 : vector<2x128xf32>, i32 -> vector<2x128xf32>
    %c4_i32_24 = arith.constant 4 : i32
    %61 = vector.broadcast %c4_i32_24 : i32 to vector<2x128xi32>
    %62 = arith.andi %8, %61 : vector<2x128xi32>
    %c0_i32_25 = arith.constant 0 : i32
    %63 = vector.broadcast %c0_i32_25 : i32 to vector<2x128xi32>
    %64 = arith.cmpi eq, %62, %63 : vector<2x128xi32>
    %65 = arith.select %64, %59, %60 : vector<2x128xi1>, vector<2x128xf32>
    %66 = arith.addf %58, %65 : vector<2x128xf32>
    %c120_i32_26 = arith.constant 120 : i32
    %67 = tpu.dynamic_rotate %66 by %c120_i32_26 dim 1 : vector<2x128xf32>, i32 -> vector<2x128xf32>
    %c8_i32_27 = arith.constant 8 : i32
    %68 = tpu.dynamic_rotate %66 by %c8_i32_27 dim 1 : vector<2x128xf32>, i32 -> vector<2x128xf32>
    %c8_i32_28 = arith.constant 8 : i32
    %69 = vector.broadcast %c8_i32_28 : i32 to vector<2x128xi32>
    %70 = arith.andi %8, %69 : vector<2x128xi32>
    %c0_i32_29 = arith.constant 0 : i32
    %71 = vector.broadcast %c0_i32_29 : i32 to vector<2x128xi32>
    %72 = arith.cmpi eq, %70, %71 : vector<2x128xi32>
    %73 = arith.select %72, %67, %68 : vector<2x128xi1>, vector<2x128xf32>
    %74 = arith.addf %66, %73 : vector<2x128xf32>
    %75 = arith.divf %42, %74 : vector<2x128xf32>
    %c0_30 = arith.constant 0 : index
    %c0_31 = arith.constant 0 : index
    %76 = vector.load %arg5[%c0_30, %c0_31] : memref<2x128xf32, #tpu.memory_space<vmem>>, vector<2x128xf32>
    tpu.vector_store %arg5[%c0_30, %c0_31], %75 {strides = array<i32>} : memref<2x128xf32, #tpu.memory_space<vmem>>, vector<2x128xf32>,
    return
  }
  func.func @transform_0(%arg0: i32) -> (i32, i32) {
    %c0_i32 = arith.constant 0 : i32
    %c0_i32_0 = arith.constant 0 : i32
    %c0_i32_1 = arith.constant 0 : i32
    return %c0_i32, %c0_i32_0 : i32, i32
  }
  func.func @transform_1(%arg0: i32) -> (i32, i32) {
    %c0_i32 = arith.constant 0 : i32
    %c0_i32_0 = arith.constant 0 : i32
    return %arg0, %c0_i32 : i32, i32
  }
  func.func @transform_2(%arg0: i32) -> (i32, i32) {
    %c0_i32 = arith.constant 0 : i32
    %c0_i32_0 = arith.constant 0 : i32
    return %c0_i32, %arg0 : i32, i32
  }
  func.func @transform_3(%arg0: i32) -> (i32, i32) {
    %c0_i32 = arith.constant 0 : i32
    %c0_i32_0 = arith.constant 0 : i32
    return %c0_i32, %arg0 : i32, i32
  }
  func.func @transform_4(%arg0: i32) -> (i32, i32) {
    %c0_i32 = arith.constant 0 : i32
    %c0_i32_0 = arith.constant 0 : i32
    return %c0_i32, %arg0 : i32, i32
  }
}

</mosaic_0001>

<llo_original>
// kernel: tpu_custom_call.1
$region0: #{tpu_custom_call.1}
  #allocation0 [shape = 'u32[]', space=smem, size = 0x4, offset = 0x4, fixed_abs, tag = 'smem constant byte address 0x4 - core index']
  #allocation1 [shape = 'u32[144,128]{1,0:T(1,128)}', space=vmem, size = 0x12000, scoped, tag = 'internal scratch']
  %s0 = inlined_call_operand.vmem [shape: s32[2,8], index: 0, kind: input, shape index: {}]
  %s1 = inlined_call_operand.vmem [shape: f32[128,8], index: 1, kind: input, shape index: {}]
  %s2 = inlined_call_operand.vmem [shape: f32[1,128], index: 2, kind: input, shape index: {}]
  %s3 = inlined_call_operand.hbm [shape: f32[2,128], index: 3, kind: output, shape index: {0}]
  %s4 = inlined_call_operand.hbm [shape: f32[2,128], index: 4, kind: output, shape index: {1}]
  %5 = xla_tuple %s3, %s4
  %s6 = sld [smem:[#allocation0]]
  $region30: #{tpu_custom_call.1} parent=0
    _
  %s8 = ssub.s32 1, %s6
  %s9 = scalar_select 0, %s8, %s6
  $region1: #{tpu_custom_call.1} parent=0
    #allocation2 [shape = 'u8[1024]{0}', space=vmem, size = 0x400, scoped, tag = 'output window, operand 0, single buffered']
    #allocation3 [shape = 's32[1]{0}', space=sflag, size = 0x4, scoped, tag = 'scoped memory for tpu_custom_call.1']
    #allocation4 [shape = 'u8[1024]{0}', space=vmem, size = 0x400, scoped, tag = 'output window, operand 1, single buffered']
    #allocation5 [shape = 's32[1]{0}', space=sflag, size = 0x4, scoped, tag = 'scoped memory for tpu_custom_call.1']
    %10 = vsyncpa [#allocation3], 0
    %11 = vsyncpa [#allocation5], 0
    // Predicated region
    $region2: #{tpu_custom_call.1} parent=1 // pred_check
      _
    $region3: #{tpu_custom_call.1} parent=1 // pred_check_branch
      %13 = sbr.rel (0) target = $region5
    $region4: #{tpu_custom_call.1} parent=1 // pred_region
      _
    $region5: #{tpu_custom_call.1} parent=1 // pred_fallthru
      _
    // Predicated region
    $region6: #{tpu_custom_call.1} parent=1 // pred_check
      _
    $region7: #{tpu_custom_call.1} parent=1 // pred_check_branch
      %15 = sbr.rel (0) target = $region9
    $region8: #{tpu_custom_call.1} parent=1 // pred_region
      _
    $region9: #{tpu_custom_call.1} parent=1 // pred_fallthru
      _
    // Predicated region
    $region10: #{tpu_custom_call.1} parent=1 // pred_check
      _
    $region11: #{tpu_custom_call.1} parent=1 // pred_check_branch
      %17 = sbr.rel (0) target = $region13
    $region12: #{tpu_custom_call.1} parent=1 // pred_region
      _
    $region13: #{tpu_custom_call.1} parent=1 // pred_fallthru
      _
    %v18 = vld [vmem:[%s0] sm:$0x3]
    %v19 = vcvt.s32.f32 %v18
    %v20 = vld [vmem:[%s1] sm:$0xff]
    %v21 = vld [vmem:[%s1 + $0x8] sm:$0xff]
    %v22 = vld [vmem:[%s1 + $0x10] sm:$0xff]
    %v23 = vld [vmem:[%s1 + $0x18] sm:$0xff]
    %v24 = vld [vmem:[%s1 + $0x20] sm:$0xff]
    %v25 = vld [vmem:[%s1 + $0x28] sm:$0xff]
    %v26 = vld [vmem:[%s1 + $0x30] sm:$0xff]
    %v27 = vld [vmem:[%s1 + $0x38] sm:$0xff]
    %v28 = vld [vmem:[%s1 + $0x40] sm:$0xff]
    %v29 = vld [vmem:[%s1 + $0x48] sm:$0xff]
    %v30 = vld [vmem:[%s1 + $0x50] sm:$0xff]
    %v31 = vld [vmem:[%s1 + $0x58] sm:$0xff]
    %v32 = vld [vmem:[%s1 + $0x60] sm:$0xff]
    %v33 = vld [vmem:[%s1 + $0x68] sm:$0xff]
    %v34 = vld [vmem:[%s1 + $0x70] sm:$0xff]
    %v35 = vld [vmem:[%s1 + $0x78] sm:$0xff]
    %v36 = vld [vmem:[%s2] sm:$0x1]
    %v38 = vlaneseq
    %v39 = vshrl.u32 %v38, 7
    %v40 = vsub.s32 0, %v39
    %v41 = vrot.slane %v36, %v40
    %vm43 = vcmask 64512
    %v45 = vsel %vm43, %v19, 0
    %v48 = vsel %vm43, %v20, 0
    %v51 = vsel %vm43, %v21, 0
    %v54 = vsel %vm43, %v22, 0
    %v57 = vsel %vm43, %v23, 0
    %v60 = vsel %vm43, %v24, 0
    %v63 = vsel %vm43, %v25, 0
    %v66 = vsel %vm43, %v26, 0
    %v69 = vsel %vm43, %v27, 0
    %v72 = vsel %vm43, %v28, 0
    %v75 = vsel %vm43, %v29, 0
    %v78 = vsel %vm43, %v30, 0
    %v81 = vsel %vm43, %v31, 0
    %v84 = vsel %vm43, %v32, 0
    %v87 = vsel %vm43, %v33, 0
    %v90 = vsel %vm43, %v34, 0
    %v93 = vsel %vm43, %v35, 0
    %95 = vmatprep.subr.mxu0 0.0
    %96 = vmatpush1.xpose.msra.mxu0 %v48
    %97 = vmatprep.subr.mxu0 0.0
    %98 = vmatpush1.xpose.msra.mxu0 %v51
    %99 = vmatprep.subr.mxu0 0.0
    %100 = vmatpush1.xpose.msra.mxu0 %v54
    %101 = vmatprep.subr.mxu0 0.0
    %102 = vmatpush1.xpose.msra.mxu0 %v57
    %103 = vmatprep.subr.mxu0 0.0
    %104 = vmatpush1.xpose.msra.mxu0 %v60
    %105 = vmatprep.subr.mxu0 0.0
    %106 = vmatpush1.xpose.msra.mxu0 %v63
    %107 = vmatprep.subr.mxu0 0.0
    %108 = vmatpush1.xpose.msra.mxu0 %v66
    %109 = vmatprep.subr.mxu0 0.0
    %110 = vmatpush1.xpose.msra.mxu0 %v69
    %111 = vmatprep.subr.mxu0 0.0
    %112 = vmatpush1.xpose.msra.mxu0 %v72
    %113 = vmatprep.subr.mxu0 0.0
    %114 = vmatpush1.xpose.msra.mxu0 %v75
    %115 = vmatprep.subr.mxu0 0.0
    %116 = vmatpush1.xpose.msra.mxu0 %v78
    %117 = vmatprep.subr.mxu0 0.0
    %118 = vmatpush1.xpose.msra.mxu0 %v81
    %119 = vmatprep.subr.mxu0 0.0
    %120 = vmatpush1.xpose.msra.mxu0 %v84
    %121 = vmatprep.subr.mxu0 0.0
    %122 = vmatpush1.xpose.msra.mxu0 %v87
    %123 = vmatprep.subr.mxu0 0.0
    %124 = vmatpush1.xpose.msra.mxu0 %v90
    %125 = vmatprep.subr.mxu0 0.0
    %126 = vmatpush1.xpose.msra.mxu0 %v93
    %127 = vmatprep.subr.mxu0 0.0
    %128 = vmatpush1.xpose.msra.mxu0 0.0
    %129 = vmatprep.subr.mxu0 0.0
    %130 = vmatpush1.xpose.msra.mxu0 0.0
    %131 = vmatprep.subr.mxu0 0.0
    %132 = vmatpush1.xpose.msra.mxu0 0.0
    %133 = vmatprep.subr.mxu0 0.0
    %134 = vmatpush1.xpose.msra.mxu0 0.0
    %135 = vmatprep.subr.mxu0 0.0
    %136 = vmatpush1.xpose.msra.mxu0 0.0
    %137 = vmatprep.subr.mxu0 0.0
    %138 = vmatpush1.xpose.msra.mxu0 0.0
    %139 = vmatprep.subr.mxu0 0.0
    %140 = vmatpush1.xpose.msra.mxu0 0.0
    %141 = vmatprep.subr.mxu0 0.0
    %142 = vmatpush1.xpose.msra.mxu0 0.0
    %143 = vmatprep.subr.mxu0 0.0
    %144 = vmatpush1.xpose.msra.mxu0 0.0
    %145 = vmatprep.subr.mxu0 0.0
    %146 = vmatpush1.xpose.msra.mxu0 0.0
    %147 = vmatprep.subr.mxu0 0.0
    %148 = vmatpush1.xpose.msra.mxu0 0.0
    %149 = vmatprep.subr.mxu0 0.0
    %150 = vmatpush1.xpose.msra.mxu0 0.0
    %151 = vmatprep.subr.mxu0 0.0
    %152 = vmatpush1.xpose.msra.mxu0 0.0
    %153 = vmatprep.subr.mxu0 0.0
    %154 = vmatpush1.xpose.msra.mxu0 0.0
    %155 = vmatprep.subr.mxu0 0.0
    %156 = vmatpush1.xpose.msra.mxu0 0.0
    %157 = vmatprep.subr.mxu0 0.0
    %158 = vmatpush1.xpose.msra.mxu0 0.0
    %159 = vmatprep.mubr.f32.mxu0 0.0
    %160 = vmatmul.mubr.f32.gmra.mrb[0].mxu0 %v45
    %v161 = vpop.f32.mrb[0].mxu0
    %v162 = vadd.f32 %v41, %v161
    %v163 = vpop.f32.mrb[0].mxu0
    %164 = vdwg.mxu0
    %165 = vst [vmem:[#allocation2] sm:$0x3] %v162
    %v166 = vlaneseq
    %v167 = vand.u32 %v166, 127
    %168 = vrot.lane.b32.xlu0 %v162, 127
    %v169 = vpop.permute.xlu0 %168
    %170 = vrot.lane.b32.xlu0 %v162, 1
    %v171 = vpop.permute.xlu0 %170
    %v172 = vand.u32 %v167, 1
    %vm173 = vcmp.eq.s32.totalorder %v172, 0
    %v174 = vsel %vm173, %v169, %v171
    %v175 = vmax.f32 %v162, %v174
    %176 = vrot.lane.b32.xlu0 %v175, 126
    %v177 = vpop.permute.xlu0 %176
    %178 = vrot.lane.b32.xlu0 %v175, 2
    %v179 = vpop.permute.xlu0 %178
    %v180 = vand.u32 %v167, 2
    %vm181 = vcmp.eq.s32.totalorder %v180, 0
    %v182 = vsel %vm181, %v177, %v179
    %v183 = vmax.f32 %v175, %v182
    %184 = vrot.lane.b32.xlu0 %v183, 124
    %v185 = vpop.permute.xlu0 %184
    %186 = vrot.lane.b32.xlu0 %v183, 4
    %v187 = vpop.permute.xlu0 %186
    %v188 = vand.u32 %v167, 4
    %vm189 = vcmp.eq.s32.totalorder %v188, 0
    %v190 = vsel %vm189, %v185, %v187
    %v191 = vmax.f32 %v183, %v190
    %192 = vrot.lane.b32.xlu0 %v191, 120
    %v193 = vpop.permute.xlu0 %192
    %194 = vrot.lane.b32.xlu0 %v191, 8
    %v195 = vpop.permute.xlu0 %194
    %v196 = vand.u32 %v167, 8
    %vm197 = vcmp.eq.s32.totalorder %v196, 0
    %v198 = vsel %vm197, %v193, %v195
    %v199 = vmax.f32 %v191, %v198
    %v200 = vsub.f32 %v162, %v199
    %v201 = vmul.f32 %v200, 1.442695
    %v202 = vpow.pop %v201
    %203 = vrot.lane.b32.xlu0 %v202, 127
    %v204 = vpop.permute.xlu0 %203
    %205 = vrot.lane.b32.xlu0 %v202, 1
    %v206 = vpop.permute.xlu0 %205
    %v207 = vsel %vm173, %v204, %v206
    %v208 = vadd.f32 %v202, %v207
    %209 = vrot.lane.b32.xlu0 %v208, 126
    %v210 = vpop.permute.xlu0 %209
    %211 = vrot.lane.b32.xlu0 %v208, 2
    %v212 = vpop.permute.xlu0 %211
    %v213 = vsel %vm181, %v210, %v212
    %v214 = vadd.f32 %v208, %v213
    %215 = vrot.lane.b32.xlu0 %v214, 124
    %v216 = vpop.permute.xlu0 %215
    %217 = vrot.lane.b32.xlu0 %v214, 4
    %v218 = vpop.permute.xlu0 %217
    %v219 = vsel %vm189, %v216, %v218
    %v220 = vadd.f32 %v214, %v219
    %221 = vrot.lane.b32.xlu0 %v220, 120
    %v222 = vpop.permute.xlu0 %221
    %223 = vrot.lane.b32.xlu0 %v220, 8
    %v224 = vpop.permute.xlu0 %223
    %v225 = vsel %vm197, %v222, %v224
    %v226 = vadd.f32 %v220, %v225
    %v227 = vrcp.pop %v226
    %v228 = vmul.f32 %v202, %v227
    %229 = vst [vmem:[#allocation4] sm:$0x3] %v228
    // Predicated region
    $region14: #{tpu_custom_call.1} parent=1 // pred_check
      _
    $region15: #{tpu_custom_call.1} parent=1 // pred_check_branch
      %231 = sbr.rel (0) target = $region17
    $region16: #{tpu_custom_call.1} parent=1 // pred_region
      %s233 = ssub.s32 32, 32
      %234 = vsyncadd [#allocation3], %s233
      %s236 = sshll.u32 [#allocation2], 4
      %s237 = int_to_ptr.vmem [resolvable:$true] %s236
      %239 = dma.vmem_to_hbm [thread:$0]  %s237, 32, %s3, [#allocation3]
    $region17: #{tpu_custom_call.1} parent=1 // pred_fallthru
      _
    // Predicated region
    $region18: #{tpu_custom_call.1} parent=1 // pred_check
      _
    $region19: #{tpu_custom_call.1} parent=1 // pred_check_branch
      %241 = sbr.rel (0) target = $region21
    $region20: #{tpu_custom_call.1} parent=1 // pred_region
      %s243 = ssub.s32 32, 32
      %244 = vsyncadd [#allocation5], %s243
      %s246 = sshll.u32 [#allocation4], 4
      %s247 = int_to_ptr.vmem [resolvable:$true] %s246
      %249 = dma.vmem_to_hbm [thread:$0]  %s247, 32, %s4, [#allocation5]
    $region21: #{tpu_custom_call.1} parent=1 // pred_fallthru
      _
    // Predicated region
    $region22: #{tpu_custom_call.1} parent=1 // pred_check
      _
    $region23: #{tpu_custom_call.1} parent=1 // pred_check_branch
      %251 = sbr.rel (0) target = $region25
    $region24: #{tpu_custom_call.1} parent=1 // pred_region
      %252 = dma.done [#allocation3], 32
    $region25: #{tpu_custom_call.1} parent=1 // pred_fallthru
      _
    // Predicated region
    $region26: #{tpu_custom_call.1} parent=1 // pred_check
      _
    $region27: #{tpu_custom_call.1} parent=1 // pred_check_branch
      %254 = sbr.rel (0) target = $region29
    $region28: #{tpu_custom_call.1} parent=1 // pred_region
      %255 = dma.done [#allocation5], 32
    $region29: #{tpu_custom_call.1} parent=1 // pred_fallthru
      _
    %256 = vsyncpa [#allocation3], 1
    %257 = vsyncpa [#allocation5], 1

</llo_original>
